<compile_context>
chip_gen: v7x
topology: tpu7x:2x2x1
jax: 0.10.0
libtpu: 0.0.40
codegen_flags: <defaults>
</compile_context>

<pallas_src>
import jax
import jax.numpy as jnp
from jax.experimental import pallas as pl
from jax.experimental.pallas import tpu as pltpu


# ---------------------------------------------------------------------------
# Pallas kernel (one grid step = one node tile, all batches, all four views)
# ---------------------------------------------------------------------------

def _mvgrl_disc_kernel(c_ref, wT_ref, bias_ref,
                       h1_ref, h2_ref, h3_ref, h4_ref,
                       o1_ref, o2_ref, o3_ref, o4_ref):
    # Stacked summary projection: u = [c1; c2] @ W^T  -> [2B, n_h].
    # c / W_T blocks have constant index_maps, so they stay VMEM-resident
    # across grid steps; only this tiny matmul is recomputed per tile.
    u = jnp.dot(c_ref[...], wT_ref[...],
                preferred_element_type=jnp.float32)          # [2B, n_h]

    b = h1_ref.shape[0]                                      # static B
    bias = bias_ref[0]                                       # scalar from SMEM

    # Hoist the broadcasts: each u_k is materialized once and reused twice.
    u1 = u[:b][:, None, :]                                   # [B, 1, n_h] (from c1)
    u2 = u[b:][:, None, :]                                   # [B, 1, n_h] (from c2)

    # VPU multiply + XLU lane reduction per node tile (no degenerate (n_h,1)
    # MXU matvecs), stored directly into each score's own output block.
    o1_ref[...] = (jnp.sum(h2_ref[...] * u1, axis=-1) + bias).astype(o1_ref.dtype)
    o2_ref[...] = (jnp.sum(h1_ref[...] * u2, axis=-1) + bias).astype(o2_ref.dtype)
    o3_ref[...] = (jnp.sum(h4_ref[...] * u1, axis=-1) + bias).astype(o3_ref.dtype)
    o4_ref[...] = (jnp.sum(h3_ref[...] * u2, axis=-1) + bias).astype(o4_ref.dtype)


# ---------------------------------------------------------------------------
# Wrapper
# ---------------------------------------------------------------------------

def _round_up(x, m):
    return (x + m - 1) // m * m


def _choose_node_tile(B, N, n_h, vmem_budget_bytes=24 * 1024 * 1024):
    """Largest node tile (multiple of 8, <=512) whose 4 double-buffered h
    views fit the VMEM budget, accounting for f32 lane padding of n_h."""
    n_h_pad = _round_up(max(n_h, 1), 128)
    bytes_per_node_row = 4 * 2 * B * n_h_pad * 4      # 4 views x 2 buffers x f32
    tn = (vmem_budget_bytes // bytes_per_node_row) // 8 * 8
    tn = max(8, min(512, tn))
    tn = min(tn, _round_up(N, 8))
    return int(tn)


def mvgrl_discriminator(c1, c2, h1, h2, h3, h4, W, bias):
    """c1,c2: [B,n_h]; h1..h4: [B,N,n_h]; W: [n_h,n_h]; bias: [1] -> [B,4N].

    s_bias1 / s_bias2 of the PyTorch forward are accepted there but never
    used in its body, so they are intentionally omitted here.
    """
    B, N, n_h = h1.shape
    dtype = h1.dtype

    tn = _choose_node_tile(B, N, n_h)
    n_pad = _round_up(N, tn)
    nt = n_pad // tn

    # Pad the node axis so every grid tile is full; padded rows are zero, so
    # their scores are just `bias` and are sliced off below.
    if n_pad != N:
        pad = ((0, 0), (0, n_pad - N), (0, 0))
        h1, h2, h3, h4 = (jnp.pad(h, pad) for h in (h1, h2, h3, h4))

    # Stack the two summaries (one MXU matmul in-kernel) and pre-transpose W
    # once in XLA so the kernel does a plain (1,0) contraction.
    c_stack = jnp.concatenate([c1, c2], axis=0)        # [2B, n_h]
    w_t = W.T                                          # [n_h, n_h]

    const2d = lambda j: (0, 0)
    h_spec = pl.BlockSpec((B, tn, n_h), lambda j: (0, j, 0))
    out_spec = pl.BlockSpec((B, tn), lambda j: (0, j))
    out_sds = jax.ShapeDtypeStruct((B, n_pad), dtype)

    flops = nt * 2 * (2 * B) * n_h * n_h + 4 * 2 * B * n_pad * n_h
    bytes_accessed = 4 * (4 * B * n_pad * n_h + 2 * B * n_h + n_h * n_h + 1
                          + 4 * B * n_pad)

    s1, s2, s3, s4 = pl.pallas_call(
        _mvgrl_disc_kernel,
        grid=(nt,),
        in_specs=[
            pl.BlockSpec((2 * B, n_h), const2d),                 # stacked c
            pl.BlockSpec((n_h, n_h), const2d),                   # W^T
            pl.BlockSpec(memory_space=pltpu.MemorySpace.SMEM),   # bias scalar
            h_spec, h_spec, h_spec, h_spec,                      # h1..h4 tiles
        ],
        out_specs=(out_spec, out_spec, out_spec, out_spec),
        out_shape=(out_sds, out_sds, out_sds, out_sds),
        compiler_params=pltpu.CompilerParams(
            dimension_semantics=("parallel",),       # megacore-shard node tiles
            vmem_limit_bytes=48 * 1024 * 1024,       # > 16/32 MiB defaults, < v7x 64 MiB
        ),
        cost_estimate=pl.CostEstimate(flops=flops, transcendentals=0,
                                      bytes_accessed=bytes_accessed),
    )(c_stack, w_t, bias, h1, h2, h3, h4)

    # Cheap wrapper-side concat of the four scores into [B, 4N] logits.
    return jnp.concatenate([s1[:, :N], s2[:, :N], s3[:, :N], s4[:, :N]], axis=1)


# ---------------------------------------------------------------------------
# Main
# ---------------------------------------------------------------------------

if __name__ == "__main__":
    B, N, N_H = 2, 32, 64          # graphs, nodes per graph, hidden dim

    root = jax.random.PRNGKey(0)
    k_w, k_c1, k_c2, k_h1, k_h2, k_h3, k_h4 = jax.random.split(root, 7)

    # nn.Bilinear(n_h, n_h, 1): weight [1, n_h, n_h] xavier_uniform_ (gain=1),
    # bias filled with 0.0.  fan_in = n_h*n_h, fan_out = 1*n_h.
    bound = float(jnp.sqrt(6.0 / (N_H * N_H + N_H)))
    W = jax.random.uniform(k_w, (N_H, N_H), jnp.float32, -bound, bound)
    bias = jnp.zeros((1,), jnp.float32)

    c1 = jax.random.normal(k_c1, (B, N_H), jnp.float32)      # graph summaries
    c2 = jax.random.normal(k_c2, (B, N_H), jnp.float32)
    h1 = jax.random.normal(k_h1, (B, N, N_H), jnp.float32)   # node embeddings
    h2 = jax.random.normal(k_h2, (B, N, N_H), jnp.float32)
    h3 = jax.random.normal(k_h3, (B, N, N_H), jnp.float32)
    h4 = jax.random.normal(k_h4, (B, N, N_H), jnp.float32)

    logits = mvgrl_discriminator(c1, c2, h1, h2, h3, h4, W, bias)
    jax.block_until_ready(logits)

    # Pure-JAX reference of the same bilinear discriminator.
    def ref(c1, c2, h1, h2, h3, h4, W, bias):
        u1 = c1 @ W.T
        u2 = c2 @ W.T
        sc1 = jnp.sum(h2 * u1[:, None, :], axis=-1) + bias[0]
        sc2 = jnp.sum(h1 * u2[:, None, :], axis=-1) + bias[0]
        sc3 = jnp.sum(h4 * u1[:, None, :], axis=-1) + bias[0]
        sc4 = jnp.sum(h3 * u2[:, None, :], axis=-1) + bias[0]
        return jnp.concatenate([sc1, sc2, sc3, sc4], axis=1)

    expected = ref(c1, c2, h1, h2, h3, h4, W, bias)
    assert logits.shape == (B, 4 * N), logits.shape
    assert bool(jnp.all(jnp.isfinite(logits)))
    assert jnp.allclose(logits, expected, rtol=1e-2, atol=1e-2)
    print("KERNEL_OK")
</pallas_src>

<mosaic_0001>
module attributes {stable_mosaic.version = 11 : i64} {
  func.func @_mvgrl_disc_kernel(%arg0: i32, %arg1: memref<4x64xf32, #tpu.memory_space<vmem>>, %arg2: memref<64x64xf32, #tpu.memory_space<vmem>>, %arg3: memref<1xf32, #tpu.memory_space<smem>>, %arg4: memref<2x32x64xf32, #tpu.memory_space<vmem>>, %arg5: memref<2x32x64xf32, #tpu.memory_space<vmem>>, %arg6: memref<2x32x64xf32, #tpu.memory_space<vmem>>, %arg7: memref<2x32x64xf32, #tpu.memory_space<vmem>>, %arg8: memref<2x32xf32, #tpu.memory_space<vmem>>, %arg9: memref<2x32xf32, #tpu.memory_space<vmem>>, %arg10: memref<2x32xf32, #tpu.memory_space<vmem>>, %arg11: memref<2x32xf32, #tpu.memory_space<vmem>>) attributes {dimension_semantics = [#tpu.dimension_semantics<parallel>], iteration_bounds = array<i64: 1>, scalar_prefetch = 0 : i64, scratch_operands = 0 : i64, tpu.core_type = #tpu.core_type<tc>, window_params = [{pipeline_mode = #tpu.pipeline_mode<synchronous>, transform_indices = @transform_0, window_bounds = array<i64: 4, 64>}, {pipeline_mode = #tpu.pipeline_mode<synchronous>, transform_indices = @transform_1, window_bounds = array<i64: 64, 64>}, {transform_indices = @transform_2, window_bounds = array<i64: 1>}, {transform_indices = @transform_3, window_bounds = array<i64: 2, 32, 64>}, {transform_indices = @transform_4, window_bounds = array<i64: 2, 32, 64>}, {transform_indices = @transform_5, window_bounds = array<i64: 2, 32, 64>}, {transform_indices = @transform_6, window_bounds = array<i64: 2, 32, 64>}, {transform_indices = @transform_7, window_bounds = array<i64: 2, 32>}, {transform_indices = @transform_8, window_bounds = array<i64: 2, 32>}, {transform_indices = @transform_9, window_bounds = array<i64: 2, 32>}, {transform_indices = @transform_10, window_bounds = array<i64: 2, 32>}]} {
    %c0 = arith.constant 0 : index
    %c0_0 = arith.constant 0 : index
    %0 = vector.load %arg1[%c0, %c0_0] : memref<4x64xf32, #tpu.memory_space<vmem>>, vector<4x64xf32>
    %c0_1 = arith.constant 0 : index
    %c0_2 = arith.constant 0 : index
    %1 = vector.load %arg2[%c0_1, %c0_2] : memref<64x64xf32, #tpu.memory_space<vmem>>, vector<64x64xf32>
    %cst = arith.constant dense<0.000000e+00> : vector<4x64xf32>
    %2 = tpu.matmul %0, %1, %cst {dimension_numbers = #tpu.dot_dimension_numbers<[1], [0], [0], [1], [0, 0, 1, 1], [], []>} : vector<4x64xf32>, vector<64x64xf32>, vector<4x64xf32> -> vector<4x64xf32>
    %c0_3 = arith.constant 0 : index
    %3 = memref.load %arg3[%c0_3] : memref<1xf32, #tpu.memory_space<smem>>
    %4 = vector.extract_strided_slice %2 {offsets = [0, 0], sizes = [2, 64], strides = [1, 1]} : vector<4x64xf32> to vector<2x64xf32>
    %5 = vector.shape_cast %4 : vector<2x64xf32> to vector<2x1x64xf32>
    %6 = vector.extract_strided_slice %2 {offsets = [2, 0], sizes = [2, 64], strides = [1, 1]} : vector<4x64xf32> to vector<2x64xf32>
    %7 = vector.shape_cast %6 : vector<2x64xf32> to vector<2x1x64xf32>
    %c0_4 = arith.constant 0 : index
    %c0_5 = arith.constant 0 : index
    %c0_6 = arith.constant 0 : index
    %8 = vector.load %arg5[%c0_4, %c0_5, %c0_6] : memref<2x32x64xf32, #tpu.memory_space<vmem>>, vector<2x32x64xf32>
    %9 = vector.broadcast %5 : vector<2x1x64xf32> to vector<2x32x64xf32>
    %10 = arith.mulf %8, %9 : vector<2x32x64xf32>
    %cst_7 = arith.constant dense<0.000000e+00> : vector<2x32xf32>
    %11 = vector.multi_reduction <add>, %10, %cst_7 [2] : vector<2x32x64xf32> to vector<2x32xf32>
    %12 = vector.broadcast %3 : f32 to vector<2x32xf32>
    %13 = arith.addf %11, %12 : vector<2x32xf32>
    %c0_8 = arith.constant 0 : index
    %c0_9 = arith.constant 0 : index
    %14 = vector.load %arg8[%c0_8, %c0_9] : memref<2x32xf32, #tpu.memory_space<vmem>>, vector<2x32xf32>
    tpu.vector_store %arg8[%c0_8, %c0_9], %13 {strides = array<i32>} : memref<2x32xf32, #tpu.memory_space<vmem>>, vector<2x32xf32>,
    %c0_10 = arith.constant 0 : index
    %c0_11 = arith.constant 0 : index
    %c0_12 = arith.constant 0 : index
    %15 = vector.load %arg4[%c0_10, %c0_11, %c0_12] : memref<2x32x64xf32, #tpu.memory_space<vmem>>, vector<2x32x64xf32>
    %16 = vector.broadcast %7 : vector<2x1x64xf32> to vector<2x32x64xf32>
    %17 = arith.mulf %15, %16 : vector<2x32x64xf32>
    %cst_13 = arith.constant dense<0.000000e+00> : vector<2x32xf32>
    %18 = vector.multi_reduction <add>, %17, %cst_13 [2] : vector<2x32x64xf32> to vector<2x32xf32>
    %19 = vector.broadcast %3 : f32 to vector<2x32xf32>
    %20 = arith.addf %18, %19 : vector<2x32xf32>
    %c0_14 = arith.constant 0 : index
    %c0_15 = arith.constant 0 : index
    %21 = vector.load %arg9[%c0_14, %c0_15] : memref<2x32xf32, #tpu.memory_space<vmem>>, vector<2x32xf32>
    tpu.vector_store %arg9[%c0_14, %c0_15], %20 {strides = array<i32>} : memref<2x32xf32, #tpu.memory_space<vmem>>, vector<2x32xf32>,
    %c0_16 = arith.constant 0 : index
    %c0_17 = arith.constant 0 : index
    %c0_18 = arith.constant 0 : index
    %22 = vector.load %arg7[%c0_16, %c0_17, %c0_18] : memref<2x32x64xf32, #tpu.memory_space<vmem>>, vector<2x32x64xf32>
    %23 = vector.broadcast %5 : vector<2x1x64xf32> to vector<2x32x64xf32>
    %24 = arith.mulf %22, %23 : vector<2x32x64xf32>
    %cst_19 = arith.constant dense<0.000000e+00> : vector<2x32xf32>
    %25 = vector.multi_reduction <add>, %24, %cst_19 [2] : vector<2x32x64xf32> to vector<2x32xf32>
    %26 = vector.broadcast %3 : f32 to vector<2x32xf32>
    %27 = arith.addf %25, %26 : vector<2x32xf32>
    %c0_20 = arith.constant 0 : index
    %c0_21 = arith.constant 0 : index
    %28 = vector.load %arg10[%c0_20, %c0_21] : memref<2x32xf32, #tpu.memory_space<vmem>>, vector<2x32xf32>
    tpu.vector_store %arg10[%c0_20, %c0_21], %27 {strides = array<i32>} : memref<2x32xf32, #tpu.memory_space<vmem>>, vector<2x32xf32>,
    %c0_22 = arith.constant 0 : index
    %c0_23 = arith.constant 0 : index
    %c0_24 = arith.constant 0 : index
    %29 = vector.load %arg6[%c0_22, %c0_23, %c0_24] : memref<2x32x64xf32, #tpu.memory_space<vmem>>, vector<2x32x64xf32>
    %30 = vector.broadcast %7 : vector<2x1x64xf32> to vector<2x32x64xf32>
    %31 = arith.mulf %29, %30 : vector<2x32x64xf32>
    %cst_25 = arith.constant dense<0.000000e+00> : vector<2x32xf32>
    %32 = vector.multi_reduction <add>, %31, %cst_25 [2] : vector<2x32x64xf32> to vector<2x32xf32>
    %33 = vector.broadcast %3 : f32 to vector<2x32xf32>
    %34 = arith.addf %32, %33 : vector<2x32xf32>
    %c0_26 = arith.constant 0 : index
    %c0_27 = arith.constant 0 : index
    %35 = vector.load %arg11[%c0_26, %c0_27] : memref<2x32xf32, #tpu.memory_space<vmem>>, vector<2x32xf32>
    tpu.vector_store %arg11[%c0_26, %c0_27], %34 {strides = array<i32>} : memref<2x32xf32, #tpu.memory_space<vmem>>, vector<2x32xf32>,
    return
  }
  func.func @transform_0(%arg0: i32) -> (i32, i32) {
    %c0_i32 = arith.constant 0 : i32
    %c0_i32_0 = arith.constant 0 : i32
    %c0_i32_1 = arith.constant 0 : i32
    return %c0_i32, %c0_i32_0 : i32, i32
  }
  func.func @transform_1(%arg0: i32) -> (i32, i32) {
    %c0_i32 = arith.constant 0 : i32
    %c0_i32_0 = arith.constant 0 : i32
    %c0_i32_1 = arith.constant 0 : i32
    return %c0_i32, %c0_i32_0 : i32, i32
  }
  func.func @transform_2(%arg0: i32) -> i32 {
    %c0_i32 = arith.constant 0 : i32
    %c0_i32_0 = arith.constant 0 : i32
    return %c0_i32 : i32
  }
  func.func @transform_3(%arg0: i32) -> (i32, i32, i32) {
    %c0_i32 = arith.constant 0 : i32
    %c0_i32_0 = arith.constant 0 : i32
    %c0_i32_1 = arith.constant 0 : i32
    return %c0_i32, %arg0, %c0_i32_0 : i32, i32, i32
  }
  func.func @transform_4(%arg0: i32) -> (i32, i32, i32) {
    %c0_i32 = arith.constant 0 : i32
    %c0_i32_0 = arith.constant 0 : i32
    %c0_i32_1 = arith.constant 0 : i32
    return %c0_i32, %arg0, %c0_i32_0 : i32, i32, i32
  }
  func.func @transform_5(%arg0: i32) -> (i32, i32, i32) {
    %c0_i32 = arith.constant 0 : i32
    %c0_i32_0 = arith.constant 0 : i32
    %c0_i32_1 = arith.constant 0 : i32
    return %c0_i32, %arg0, %c0_i32_0 : i32, i32, i32
  }
  func.func @transform_6(%arg0: i32) -> (i32, i32, i32) {
    %c0_i32 = arith.constant 0 : i32
    %c0_i32_0 = arith.constant 0 : i32
    %c0_i32_1 = arith.constant 0 : i32
    return %c0_i32, %arg0, %c0_i32_0 : i32, i32, i32
  }
  func.func @transform_7(%arg0: i32) -> (i32, i32) {
    %c0_i32 = arith.constant 0 : i32
    %c0_i32_0 = arith.constant 0 : i32
    return %c0_i32, %arg0 : i32, i32
  }
  func.func @transform_8(%arg0: i32) -> (i32, i32) {
    %c0_i32 = arith.constant 0 : i32
    %c0_i32_0 = arith.constant 0 : i32
    return %c0_i32, %arg0 : i32, i32
  }
  func.func @transform_9(%arg0: i32) -> (i32, i32) {
    %c0_i32 = arith.constant 0 : i32
    %c0_i32_0 = arith.constant 0 : i32
    return %c0_i32, %arg0 : i32, i32
  }
  func.func @transform_10(%arg0: i32) -> (i32, i32) {
    %c0_i32 = arith.constant 0 : i32
    %c0_i32_0 = arith.constant 0 : i32
    return %c0_i32, %arg0 : i32, i32
  }
}

</mosaic_0001>

<llo_original>
// kernel: tpu_custom_call.1
$region0: #{tpu_custom_call.1}
  #allocation0 [shape = 'u32[]', space=smem, size = 0x4, offset = 0x4, fixed_abs, tag = 'smem constant byte address 0x4 - core index']
  #allocation1 [shape = 'u32[144,128]{1,0:T(1,128)}', space=vmem, size = 0x12000, scoped, tag = 'internal scratch']
  #allocation2 [shape = 'f32[1]{0:T(128)S(6)}', space=smem, size = 0x200, scoped, tag = 'scoped memory for tpu_custom_call.1']
  %s0 = inlined_call_operand.hbm [shape: f32[4,64], index: 0, kind: input, shape index: {}]
  %s1 = inlined_call_operand.hbm [shape: f32[64,64], index: 1, kind: input, shape index: {}]
  %s2 = inlined_call_operand.<no memory space> [shape: f32[1], index: 2, kind: input, shape index: {}]
  %s3 = inlined_call_operand.hbm [shape: f32[2,32,64], index: 3, kind: input, shape index: {}]
  %s4 = inlined_call_operand.hbm [shape: f32[2,32,64], index: 4, kind: input, shape index: {}]
  %s5 = inlined_call_operand.hbm [shape: f32[2,32,64], index: 5, kind: input, shape index: {}]
  %s6 = inlined_call_operand.hbm [shape: f32[2,32,64], index: 6, kind: input, shape index: {}]
  %s7 = inlined_call_operand.hbm [shape: f32[2,32], index: 7, kind: output, shape index: {0}]
  %s8 = inlined_call_operand.hbm [shape: f32[2,32], index: 8, kind: output, shape index: {1}]
  %s9 = inlined_call_operand.hbm [shape: f32[2,32], index: 9, kind: output, shape index: {2}]
  %s10 = inlined_call_operand.hbm [shape: f32[2,32], index: 10, kind: output, shape index: {3}]
  %11 = xla_tuple %s7, %s8, %s9, %s10
  %s12 = sld [smem:[#allocation0]]
  $region86: #{tpu_custom_call.1} parent=0
    _
  %s14 = ssub.s32 1, %s12
  %s15 = scalar_select 0, %s14, %s12
  %16 = sst [smem:[#allocation2]] %s2
  $region1: #{tpu_custom_call.1} parent=0
    #allocation3 [shape = 'u8[2048]{0}', space=vmem, size = 0x800, scoped, tag = 'input window, operand 0, single buffered']
    #allocation4 [shape = 's32[1]{0}', space=sflag, size = 0x4, scoped, tag = 'scoped memory for tpu_custom_call.1']
    #allocation5 [shape = 's32[1]{0}', space=sflag, size = 0x4, scoped, tag = 'scoped memory for tpu_custom_call.1']
    #allocation6 [shape = 'u8[32768]{0}', space=vmem, size = 0x8000, scoped, tag = 'input window, operand 1, single buffered']
    #allocation7 [shape = 's32[1]{0}', space=sflag, size = 0x4, scoped, tag = 'scoped memory for tpu_custom_call.1']
    #allocation8 [shape = 'u8[32768]{0}', space=vmem, size = 0x8000, scoped, tag = 'input window, operand 3, single buffered']
    #allocation9 [shape = 'u8[32768]{0}', space=vmem, size = 0x8000, scoped, tag = 'input window, operand 4, single buffered']
    #allocation10 [shape = 's32[1]{0}', space=sflag, size = 0x4, scoped, tag = 'scoped memory for tpu_custom_call.1']
    #allocation11 [shape = 'u8[32768]{0}', space=vmem, size = 0x8000, scoped, tag = 'input window, operand 5, single buffered']
    #allocation12 [shape = 'u8[32768]{0}', space=vmem, size = 0x8000, scoped, tag = 'input window, operand 6, single buffered']
    #allocation13 [shape = 's32[1]{0}', space=sflag, size = 0x4, scoped, tag = 'scoped memory for tpu_custom_call.1']
    #allocation14 [shape = 'u8[1024]{0}', space=vmem, size = 0x400, scoped, tag = 'output window, operand 0, single buffered']
    #allocation15 [shape = 'u8[1024]{0}', space=vmem, size = 0x400, scoped, tag = 'output window, operand 1, single buffered']
    #allocation16 [shape = 's32[1]{0}', space=sflag, size = 0x4, scoped, tag = 'scoped memory for tpu_custom_call.1']
    #allocation17 [shape = 'u8[1024]{0}', space=vmem, size = 0x400, scoped, tag = 'output window, operand 2, single buffered']
    #allocation18 [shape = 'u8[1024]{0}', space=vmem, size = 0x400, scoped, tag = 'output window, operand 3, single buffered']
    #allocation19 [shape = 's32[1]{0}', space=sflag, size = 0x4, scoped, tag = 'scoped memory for tpu_custom_call.1']
    %17 = vsyncpa [#allocation4], 0
    %18 = vsyncpa [#allocation7], 0
    %19 = vsyncpa [#allocation10], 0
    %20 = vsyncpa [#allocation13], 0
    %21 = vsyncpa [#allocation5], 0
    %22 = vsyncpa [#allocation16], 0
    %23 = vsyncpa [#allocation19], 0
    // Predicated region
    $region2: #{tpu_custom_call.1} parent=1 // pred_check
      _
    $region3: #{tpu_custom_call.1} parent=1 // pred_check_branch
      %25 = sbr.rel (0) target = $region5
    $region4: #{tpu_custom_call.1} parent=1 // pred_region
      %s27 = ssub.s32 64, 64
      %28 = vsyncadd [#allocation4], %s27
      %s30 = sshll.u32 [#allocation3], 4
      %s31 = int_to_ptr.vmem [resolvable:$true] %s30
      %33 = dma.hbm_to_vmem [thread:$0]  %s0, 64, %s31, [#allocation4]
    $region5: #{tpu_custom_call.1} parent=1 // pred_fallthru
      _
    // Predicated region
    $region6: #{tpu_custom_call.1} parent=1 // pred_check
      _
    $region7: #{tpu_custom_call.1} parent=1 // pred_check_branch
      %35 = sbr.rel (0) target = $region9
    $region8: #{tpu_custom_call.1} parent=1 // pred_region
      %s37 = ssub.s32 1024, 1024
      %38 = vsyncadd [#allocation7], %s37
      %s39 = sshll.u32 [#allocation6], 4
      %s40 = int_to_ptr.vmem [resolvable:$true] %s39
      %45 = dma.hbm_to_vmem [thread:$0]  %s1, 1024, %s40, [#allocation7], 128, 128, 8
    $region9: #{tpu_custom_call.1} parent=1 // pred_fallthru
      _
    // Predicated region
    $region10: #{tpu_custom_call.1} parent=1 // pred_check
      _
    $region11: #{tpu_custom_call.1} parent=1 // pred_check_branch
      %47 = sbr.rel (0) target = $region13
    $region12: #{tpu_custom_call.1} parent=1 // pred_region
      _
    $region13: #{tpu_custom_call.1} parent=1 // pred_fallthru
      _
    // Predicated region
    $region14: #{tpu_custom_call.1} parent=1 // pred_check
      _
    $region15: #{tpu_custom_call.1} parent=1 // pred_check_branch
      %49 = sbr.rel (0) target = $region17
    $region16: #{tpu_custom_call.1} parent=1 // pred_region
      %s51 = ssub.s32 1024, 1024
      %52 = vsyncadd [#allocation7], %s51
      %s53 = sshll.u32 [#allocation8], 4
      %s54 = int_to_ptr.vmem [resolvable:$true] %s53
      %59 = dma.hbm_to_vmem [thread:$0]  %s3, 1024, %s54, [#allocation7], 128, 128, 8
    $region17: #{tpu_custom_call.1} parent=1 // pred_fallthru
      _
    // Predicated region
    $region18: #{tpu_custom_call.1} parent=1 // pred_check
      _
    $region19: #{tpu_custom_call.1} parent=1 // pred_check_branch
      %61 = sbr.rel (0) target = $region21
    $region20: #{tpu_custom_call.1} parent=1 // pred_region
      %s63 = ssub.s32 1024, 1024
      %64 = vsyncadd [#allocation10], %s63
      %s65 = sshll.u32 [#allocation9], 4
      %s66 = int_to_ptr.vmem [resolvable:$true] %s65
      %71 = dma.hbm_to_vmem [thread:$0]  %s4, 1024, %s66, [#allocation10], 128, 128, 8
    $region21: #{tpu_custom_call.1} parent=1 // pred_fallthru
      _
    // Predicated region
    $region22: #{tpu_custom_call.1} parent=1 // pred_check
      _
    $region23: #{tpu_custom_call.1} parent=1 // pred_check_branch
      %73 = sbr.rel (0) target = $region25
    $region24: #{tpu_custom_call.1} parent=1 // pred_region
      %s75 = ssub.s32 1024, 1024
      %76 = vsyncadd [#allocation10], %s75
      %s77 = sshll.u32 [#allocation11], 4
      %s78 = int_to_ptr.vmem [resolvable:$true] %s77
      %83 = dma.hbm_to_vmem [thread:$0]  %s5, 1024, %s78, [#allocation10], 128, 128, 8
    $region25: #{tpu_custom_call.1} parent=1 // pred_fallthru
      _
    // Predicated region
    $region26: #{tpu_custom_call.1} parent=1 // pred_check
      _
    $region27: #{tpu_custom_call.1} parent=1 // pred_check_branch
      %85 = sbr.rel (0) target = $region29
    $region28: #{tpu_custom_call.1} parent=1 // pred_region
      %s87 = ssub.s32 1024, 1024
      %88 = vsyncadd [#allocation13], %s87
      %s89 = sshll.u32 [#allocation12], 4
      %s90 = int_to_ptr.vmem [resolvable:$true] %s89
      %95 = dma.hbm_to_vmem [thread:$0]  %s6, 1024, %s90, [#allocation13], 128, 128, 8
    $region29: #{tpu_custom_call.1} parent=1 // pred_fallthru
      _
    // Predicated region
    $region30: #{tpu_custom_call.1} parent=1 // pred_check
      _
    $region31: #{tpu_custom_call.1} parent=1 // pred_check_branch
      %97 = sbr.rel (0) target = $region33
    $region32: #{tpu_custom_call.1} parent=1 // pred_region
      %98 = dma.done [#allocation4], 64
    $region33: #{tpu_custom_call.1} parent=1 // pred_fallthru
      _
    // Predicated region
    $region34: #{tpu_custom_call.1} parent=1 // pred_check
      _
    $region35: #{tpu_custom_call.1} parent=1 // pred_check_branch
      %100 = sbr.rel (0) target = $region37
    $region36: #{tpu_custom_call.1} parent=1 // pred_region
      %101 = dma.done [#allocation7], 1024
    $region37: #{tpu_custom_call.1} parent=1 // pred_fallthru
      _
    // Predicated region
    $region38: #{tpu_custom_call.1} parent=1 // pred_check
      _
    $region39: #{tpu_custom_call.1} parent=1 // pred_check_branch
      %103 = sbr.rel (0) target = $region41
    $region40: #{tpu_custom_call.1} parent=1 // pred_region
      %104 = dma.done [#allocation7], 1024
    $region41: #{tpu_custom_call.1} parent=1 // pred_fallthru
      _
    // Predicated region
    $region42: #{tpu_custom_call.1} parent=1 // pred_check
      _
    $region43: #{tpu_custom_call.1} parent=1 // pred_check_branch
      %106 = sbr.rel (0) target = $region45
    $region44: #{tpu_custom_call.1} parent=1 // pred_region
      %107 = dma.done [#allocation10], 1024
    $region45: #{tpu_custom_call.1} parent=1 // pred_fallthru
      _
    // Predicated region
    $region46: #{tpu_custom_call.1} parent=1 // pred_check
      _
    $region47: #{tpu_custom_call.1} parent=1 // pred_check_branch
      %109 = sbr.rel (0) target = $region49
    $region48: #{tpu_custom_call.1} parent=1 // pred_region
      %110 = dma.done [#allocation10], 1024
    $region49: #{tpu_custom_call.1} parent=1 // pred_fallthru
      _
    // Predicated region
    $region50: #{tpu_custom_call.1} parent=1 // pred_check
      _
    $region51: #{tpu_custom_call.1} parent=1 // pred_check_branch
      %112 = sbr.rel (0) target = $region53
    $region52: #{tpu_custom_call.1} parent=1 // pred_region
      %113 = dma.done [#allocation13], 1024
    $region53: #{tpu_custom_call.1} parent=1 // pred_fallthru
      _
    %v114 = vld [vmem:[#allocation3] sm:$0xf]
    %v115 = vld [vmem:[#allocation6] sm:$0xff]
    %v116 = vld [vmem:[#allocation6 + $0x8] sm:$0xff]
    %v117 = vld [vmem:[#allocation6 + $0x10] sm:$0xff]
    %v118 = vld [vmem:[#allocation6 + $0x18] sm:$0xff]
    %v119 = vld [vmem:[#allocation6 + $0x20] sm:$0xff]
    %v120 = vld [vmem:[#allocation6 + $0x28] sm:$0xff]
    %v121 = vld [vmem:[#allocation6 + $0x30] sm:$0xff]
    %v122 = vld [vmem:[#allocation6 + $0x38] sm:$0xff]
    %vm123 = vcmask 523264
    %v125 = vsel %vm123, %v114, 0
    %127 = vmatprep.subr.mxu0 0.0
    %128 = vmatpush1.msra.mxu0 %v115
    %129 = vmatprep.subr.mxu0 0.0
    %130 = vmatpush1.msra.mxu0 %v116
    %131 = vmatprep.subr.mxu0 0.0
    %132 = vmatpush1.msra.mxu0 %v117
    %133 = vmatprep.subr.mxu0 0.0
    %134 = vmatpush1.msra.mxu0 %v118
    %135 = vmatprep.subr.mxu0 0.0
    %136 = vmatpush1.msra.mxu0 %v119
    %137 = vmatprep.subr.mxu0 0.0
    %138 = vmatpush1.msra.mxu0 %v120
    %139 = vmatprep.subr.mxu0 0.0
    %140 = vmatpush1.msra.mxu0 %v121
    %141 = vmatprep.subr.mxu0 0.0
    %142 = vmatpush1.msra.mxu0 %v122
    %143 = vmatprep.subr.mxu0 0.0
    %144 = vmatpush1.msra.mxu0 0.0
    %145 = vmatprep.subr.mxu0 0.0
    %146 = vmatpush1.msra.mxu0 0.0
    %147 = vmatprep.subr.mxu0 0.0
    %148 = vmatpush1.msra.mxu0 0.0
    %149 = vmatprep.subr.mxu0 0.0
    %150 = vmatpush1.msra.mxu0 0.0
    %151 = vmatprep.subr.mxu0 0.0
    %152 = vmatpush1.msra.mxu0 0.0
    %153 = vmatprep.subr.mxu0 0.0
    %154 = vmatpush1.msra.mxu0 0.0
    %155 = vmatprep.subr.mxu0 0.0
    %156 = vmatpush1.msra.mxu0 0.0
    %157 = vmatprep.subr.mxu0 0.0
    %158 = vmatpush1.msra.mxu0 0.0
    %159 = vmatprep.subr.mxu0 0.0
    %160 = vmatpush1.msra.mxu0 0.0
    %161 = vmatprep.subr.mxu0 0.0
    %162 = vmatpush1.msra.mxu0 0.0
    %163 = vmatprep.subr.mxu0 0.0
    %164 = vmatpush1.msra.mxu0 0.0
    %165 = vmatprep.subr.mxu0 0.0
    %166 = vmatpush1.msra.mxu0 0.0
    %167 = vmatprep.subr.mxu0 0.0
    %168 = vmatpush1.msra.mxu0 0.0
    %169 = vmatprep.subr.mxu0 0.0
    %170 = vmatpush1.msra.mxu0 0.0
    %171 = vmatprep.subr.mxu0 0.0
    %172 = vmatpush1.msra.mxu0 0.0
    %173 = vmatprep.subr.mxu0 0.0
    %174 = vmatpush1.msra.mxu0 0.0
    %175 = vmatprep.subr.mxu0 0.0
    %176 = vmatpush1.msra.mxu0 0.0
    %177 = vmatprep.subr.mxu0 0.0
    %178 = vmatpush1.msra.mxu0 0.0
    %179 = vmatprep.subr.mxu0 0.0
    %180 = vmatpush1.msra.mxu0 0.0
    %181 = vmatprep.subr.mxu0 0.0
    %182 = vmatpush1.msra.mxu0 0.0
    %183 = vmatprep.subr.mxu0 0.0
    %184 = vmatpush1.msra.mxu0 0.0
    %185 = vmatprep.subr.mxu0 0.0
    %186 = vmatpush1.msra.mxu0 0.0
    %187 = vmatprep.subr.mxu0 0.0
    %188 = vmatpush1.msra.mxu0 0.0
    %189 = vmatprep.subr.mxu0 0.0
    %190 = vmatpush1.msra.mxu0 0.0
    %191 = vmatprep.mubr.f32.mxu0 0.0
    %192 = vmatmul.mubr.f32.gmra.mrb[0].mxu0 %v125
    %v193 = vpop.f32.mrb[0].mxu0
    %v194 = vadd.f32 0.0, %v193
    %v195 = vpop.f32.mrb[0].mxu0
    %196 = vdwg.mxu0
    %s197 = sld [smem:[#allocation2]]
    %v200 = vunpack.c.l.s4 1966171168
    %v201 = vunpack.c.0.s8 %v200
    %v202 = vlaneseq
    %v203 = vshrl.u32 %v202, 7
    %v204 = vsub.s32 %v201, %v203
    %v205 = vrot.slane %v194, %v204
    %v206 = vcombine.high %v205, %v205
    %v208 = vunpack.c.l.s4 1966171168
    %v209 = vunpack.c.0.s8 %v208
    %v210 = vlaneseq
    %v211 = vshrl.u32 %v210, 7
    %v212 = vsub.s32 %v209, %v211
    %v213 = vrot.slane %v205, %v212
    %v215 = vunpack.c.l.s4 1966171168
    %v216 = vunpack.c.0.s8 %v215
    %v217 = vlaneseq
    %v218 = vshrl.u32 %v217, 7
    %v219 = vsub.s32 %v216, %v218
    %v220 = vrot.slane %v206, %v219
    %v221 = vcombine.high %v213, %v213
    %v222 = vcombine.high %v220, %v220
    %v223 = vld [vmem:[#allocation9] sm:$0xff]
    %v224 = vld [vmem:[#allocation9 + $0x8] sm:$0xff]
    %v225 = vld [vmem:[#allocation9 + $0x10] sm:$0xff]
    %v226 = vld [vmem:[#allocation9 + $0x18] sm:$0xff]
    %v227 = vld [vmem:[#allocation9 + $0x20] sm:$0xff]
    %v228 = vld [vmem:[#allocation9 + $0x28] sm:$0xff]
    %v229 = vld [vmem:[#allocation9 + $0x30] sm:$0xff]
    %v230 = vld [vmem:[#allocation9 + $0x38] sm:$0xff]
    %v231 = vlaneseq
    %v232 = vshrl.u32 %v231, 7
    %v233 = vsub.s32 0, %v232
    %v234 = vrot.slane %v213, %v233
    %v235 = vlaneseq
    %v236 = vshrl.u32 %v235, 7
    %v237 = vsub.s32 0, %v236
    %v238 = vrot.slane %v220, %v237
    %v241 = vmul.f32 %v223, %v234
    %v242 = vmul.f32 %v224, %v234
    %v243 = vmul.f32 %v225, %v234
    %v244 = vmul.f32 %v226, %v234
    %v245 = vmul.f32 %v227, %v238
    %v246 = vmul.f32 %v228, %v238
    %v247 = vmul.f32 %v229, %v238
    %v248 = vmul.f32 %v230, %v238
    %v249 = vsel %vm123, %v241, 0.0
    %250 = vadd.xlane.f32.xlu0 %v249
    %v251 = vpop.xlane.xlu0 %250
    %v252 = vsel %vm123, %v242, 0.0
    %253 = vadd.xlane.f32.xlu0 %v252
    %v254 = vpop.xlane.xlu0 %253
    %v255 = vsel %vm123, %v243, 0.0
    %256 = vadd.xlane.f32.xlu0 %v255
    %v257 = vpop.xlane.xlu0 %256
    %v258 = vsel %vm123, %v244, 0.0
    %259 = vadd.xlane.f32.xlu0 %v258
    %v260 = vpop.xlane.xlu0 %259
    %v261 = vsel %vm123, %v245, 0.0
    %262 = vadd.xlane.f32.xlu0 %v261
    %v263 = vpop.xlane.xlu0 %262
    %v264 = vsel %vm123, %v246, 0.0
    %265 = vadd.xlane.f32.xlu0 %v264
    %v266 = vpop.xlane.xlu0 %265
    %v267 = vsel %vm123, %v247, 0.0
    %268 = vadd.xlane.f32.xlu0 %v267
    %v269 = vpop.xlane.xlu0 %268
    %v270 = vsel %vm123, %v248, 0.0
    %271 = vadd.xlane.f32.xlu0 %v270
    %v272 = vpop.xlane.xlu0 %271
    %v273 = vstv %s197
    %v274 = vadd.f32 %v251, %v273
    %v275 = vadd.f32 %v254, %v273
    %v276 = vadd.f32 %v257, %v273
    %v277 = vadd.f32 %v260, %v273
    %v278 = vadd.f32 %v263, %v273
    %v279 = vadd.f32 %v266, %v273
    %v280 = vadd.f32 %v269, %v273
    %v281 = vadd.f32 %v272, %v273
    %v290 = vlaneseq
    %v291 = vand.u32 %v290, 127
    %v292 = vlaneseq
    %v293 = vshrl.u32 %v292, 7
    %v294 = vsub.s32 %v291, %v293
    %v295 = vrot.slane %v274, %v294
    %v296 = vadd.s32 %v291, 4294967288
    %v297 = vlaneseq
    %v298 = vshrl.u32 %v297, 7
    %v299 = vsub.s32 %v296, %v298
    %v300 = vrot.slane %v275, %v299
    %vm301 = vcmask 130112
    %v302 = vsel %vm301, %v300, %v295
    %v303 = vadd.s32 %v291, 4294967280
    %v304 = vlaneseq
    %v305 = vshrl.u32 %v304, 7
    %v306 = vsub.s32 %v303, %v305
    %v307 = vrot.slane %v276, %v306
    %vm308 = vcmask 195712
    %v309 = vsel %vm308, %v307, %v302
    %v310 = vadd.s32 %v291, 4294967272
    %v311 = vlaneseq
    %v312 = vshrl.u32 %v311, 7
    %v313 = vsub.s32 %v310, %v312
    %v314 = vrot.slane %v277, %v313
    %vm315 = vcmask 261312
    %v316 = vsel %vm315, %v314, %v309
    %v317 = vlaneseq
    %v318 = vshrl.u32 %v317, 7
    %v319 = vsub.s32 %v291, %v318
    %v320 = vrot.slane %v278, %v319
    %v321 = vlaneseq
    %v322 = vshrl.u32 %v321, 7
    %v323 = vsub.s32 %v296, %v322
    %v324 = vrot.slane %v279, %v323
    %v325 = vsel %vm301, %v324, %v320
    %v326 = vlaneseq
    %v327 = vshrl.u32 %v326, 7
    %v328 = vsub.s32 %v303, %v327
    %v329 = vrot.slane %v280, %v328
    %v330 = vsel %vm308, %v329, %v325
    %v331 = vlaneseq
    %v332 = vshrl.u32 %v331, 7
    %v333 = vsub.s32 %v310, %v332
    %v334 = vrot.slane %v281, %v333
    %v335 = vsel %vm315, %v334, %v330
    %vm336 = vcmask 1041409
    %v337 = vsel %vm336, %v335, %v316
    %vm339 = vcmask 254976
    %340 = vst.msk [vmem:[#allocation14] sm:$0x3] %vm339, %v337
    %v341 = vld [vmem:[#allocation8] sm:$0xff]
    %v342 = vld [vmem:[#allocation8 + $0x8] sm:$0xff]
    %v343 = vld [vmem:[#allocation8 + $0x10] sm:$0xff]
    %v344 = vld [vmem:[#allocation8 + $0x18] sm:$0xff]
    %v345 = vld [vmem:[#allocation8 + $0x20] sm:$0xff]
    %v346 = vld [vmem:[#allocation8 + $0x28] sm:$0xff]
    %v347 = vld [vmem:[#allocation8 + $0x30] sm:$0xff]
    %v348 = vld [vmem:[#allocation8 + $0x38] sm:$0xff]
    %v349 = vlaneseq
    %v350 = vshrl.u32 %v349, 7
    %v351 = vsub.s32 0, %v350
    %v352 = vrot.slane %v221, %v351
    %v353 = vlaneseq
    %v354 = vshrl.u32 %v353, 7
    %v355 = vsub.s32 0, %v354
    %v356 = vrot.slane %v222, %v355
    %v359 = vmul.f32 %v341, %v352
    %v360 = vmul.f32 %v342, %v352
    %v361 = vmul.f32 %v343, %v352
    %v362 = vmul.f32 %v344, %v352
    %v363 = vmul.f32 %v345, %v356
    %v364 = vmul.f32 %v346, %v356
    %v365 = vmul.f32 %v347, %v356
    %v366 = vmul.f32 %v348, %v356
    %v367 = vsel %vm123, %v359, 0.0
    %368 = vadd.xlane.f32.xlu0 %v367
    %v369 = vpop.xlane.xlu0 %368
    %v370 = vsel %vm123, %v360, 0.0
    %371 = vadd.xlane.f32.xlu0 %v370
    %v372 = vpop.xlane.xlu0 %371
    %v373 = vsel %vm123, %v361, 0.0
    %374 = vadd.xlane.f32.xlu0 %v373
    %v375 = vpop.xlane.xlu0 %374
    %v376 = vsel %vm123, %v362, 0.0
    %377 = vadd.xlane.f32.xlu0 %v376
    %v378 = vpop.xlane.xlu0 %377
    %v379 = vsel %vm123, %v363, 0.0
    %380 = vadd.xlane.f32.xlu0 %v379
    %v381 = vpop.xlane.xlu0 %380
    %v382 = vsel %vm123, %v364, 0.0
    %383 = vadd.xlane.f32.xlu0 %v382
    %v384 = vpop.xlane.xlu0 %383
    %v385 = vsel %vm123, %v365, 0.0
    %386 = vadd.xlane.f32.xlu0 %v385
    %v387 = vpop.xlane.xlu0 %386
    %v388 = vsel %vm123, %v366, 0.0
    %389 = vadd.xlane.f32.xlu0 %v388
    %v390 = vpop.xlane.xlu0 %389
    %v391 = vadd.f32 %v369, %v273
    %v392 = vadd.f32 %v372, %v273
    %v393 = vadd.f32 %v375, %v273
    %v394 = vadd.f32 %v378, %v273
    %v395 = vadd.f32 %v381, %v273
    %v396 = vadd.f32 %v384, %v273
    %v397 = vadd.f32 %v387, %v273
    %v398 = vadd.f32 %v390, %v273
    %v407 = vlaneseq
    %v408 = vshrl.u32 %v407, 7
    %v409 = vsub.s32 %v291, %v408
    %v410 = vrot.slane %v391, %v409
    %v411 = vlaneseq
    %v412 = vshrl.u32 %v411, 7
    %v413 = vsub.s32 %v296, %v412
    %v414 = vrot.slane %v392, %v413
    %v415 = vsel %vm301, %v414, %v410
    %v416 = vlaneseq
    %v417 = vshrl.u32 %v416, 7
    %v418 = vsub.s32 %v303, %v417
    %v419 = vrot.slane %v393, %v418
    %v420 = vsel %vm308, %v419, %v415
    %v421 = vlaneseq
    %v422 = vshrl.u32 %v421, 7
    %v423 = vsub.s32 %v310, %v422
    %v424 = vrot.slane %v394, %v423
    %v425 = vsel %vm315, %v424, %v420
    %v426 = vlaneseq
    %v427 = vshrl.u32 %v426, 7
    %v428 = vsub.s32 %v291, %v427
    %v429 = vrot.slane %v395, %v428
    %v430 = vlaneseq
    %v431 = vshrl.u32 %v430, 7
    %v432 = vsub.s32 %v296, %v431
    %v433 = vrot.slane %v396, %v432
    %v434 = vsel %vm301, %v433, %v429
    %v435 = vlaneseq
    %v436 = vshrl.u32 %v435, 7
    %v437 = vsub.s32 %v303, %v436
    %v438 = vrot.slane %v397, %v437
    %v439 = vsel %vm308, %v438, %v434
    %v440 = vlaneseq
    %v441 = vshrl.u32 %v440, 7
    %v442 = vsub.s32 %v310, %v441
    %v443 = vrot.slane %v398, %v442
    %v444 = vsel %vm315, %v443, %v439
    %v445 = vsel %vm336, %v444, %v425
    %447 = vst.msk [vmem:[#allocation15] sm:$0x3] %vm339, %v445
    %v448 = vld [vmem:[#allocation12] sm:$0xff]
    %v449 = vld [vmem:[#allocation12 + $0x8] sm:$0xff]
    %v450 = vld [vmem:[#allocation12 + $0x10] sm:$0xff]
    %v451 = vld [vmem:[#allocation12 + $0x18] sm:$0xff]
    %v452 = vld [vmem:[#allocation12 + $0x20] sm:$0xff]
    %v453 = vld [vmem:[#allocation12 + $0x28] sm:$0xff]
    %v454 = vld [vmem:[#allocation12 + $0x30] sm:$0xff]
    %v455 = vld [vmem:[#allocation12 + $0x38] sm:$0xff]
    %v456 = vmul.f32 %v448, %v234
    %v457 = vmul.f32 %v449, %v234
    %v458 = vmul.f32 %v450, %v234
    %v459 = vmul.f32 %v451, %v234
    %v460 = vmul.f32 %v452, %v238
    %v461 = vmul.f32 %v453, %v238
    %v462 = vmul.f32 %v454, %v238
    %v463 = vmul.f32 %v455, %v238
    %v464 = vsel %vm123, %v456, 0.0
    %465 = vadd.xlane.f32.xlu0 %v464
    %v466 = vpop.xlane.xlu0 %465
    %v467 = vsel %vm123, %v457, 0.0
    %468 = vadd.xlane.f32.xlu0 %v467
    %v469 = vpop.xlane.xlu0 %468
    %v470 = vsel %vm123, %v458, 0.0
    %471 = vadd.xlane.f32.xlu0 %v470
    %v472 = vpop.xlane.xlu0 %471
    %v473 = vsel %vm123, %v459, 0.0
    %474 = vadd.xlane.f32.xlu0 %v473
    %v475 = vpop.xlane.xlu0 %474
    %v476 = vsel %vm123, %v460, 0.0
    %477 = vadd.xlane.f32.xlu0 %v476
    %v478 = vpop.xlane.xlu0 %477
    %v479 = vsel %vm123, %v461, 0.0
    %480 = vadd.xlane.f32.xlu0 %v479
    %v481 = vpop.xlane.xlu0 %480
    %v482 = vsel %vm123, %v462, 0.0
    %483 = vadd.xlane.f32.xlu0 %v482
    %v484 = vpop.xlane.xlu0 %483
    %v485 = vsel %vm123, %v463, 0.0
    %486 = vadd.xlane.f32.xlu0 %v485
    %v487 = vpop.xlane.xlu0 %486
    %v488 = vadd.f32 %v466, %v273
    %v489 = vadd.f32 %v469, %v273
    %v490 = vadd.f32 %v472, %v273
    %v491 = vadd.f32 %v475, %v273
    %v492 = vadd.f32 %v478, %v273
    %v493 = vadd.f32 %v481, %v273
    %v494 = vadd.f32 %v484, %v273
    %v495 = vadd.f32 %v487, %v273
    %v504 = vlaneseq
    %v505 = vshrl.u32 %v504, 7
    %v506 = vsub.s32 %v291, %v505
    %v507 = vrot.slane %v488, %v506
    %v508 = vlaneseq
    %v509 = vshrl.u32 %v508, 7
    %v510 = vsub.s32 %v296, %v509
    %v511 = vrot.slane %v489, %v510
    %v512 = vsel %vm301, %v511, %v507
    %v513 = vlaneseq
    %v514 = vshrl.u32 %v513, 7
    %v515 = vsub.s32 %v303, %v514
    %v516 = vrot.slane %v490, %v515
    %v517 = vsel %vm308, %v516, %v512
    %v518 = vlaneseq
    %v519 = vshrl.u32 %v518, 7
    %v520 = vsub.s32 %v310, %v519
    %v521 = vrot.slane %v491, %v520
    %v522 = vsel %vm315, %v521, %v517
    %v523 = vlaneseq
    %v524 = vshrl.u32 %v523, 7
    %v525 = vsub.s32 %v291, %v524
    %v526 = vrot.slane %v492, %v525
    %v527 = vlaneseq
    %v528 = vshrl.u32 %v527, 7
    %v529 = vsub.s32 %v296, %v528
    %v530 = vrot.slane %v493, %v529
    %v531 = vsel %vm301, %v530, %v526
    %v532 = vlaneseq
    %v533 = vshrl.u32 %v532, 7
    %v534 = vsub.s32 %v303, %v533
    %v535 = vrot.slane %v494, %v534
    %v536 = vsel %vm308, %v535, %v531
    %v537 = vlaneseq
    %v538 = vshrl.u32 %v537, 7
    %v539 = vsub.s32 %v310, %v538
    %v540 = vrot.slane %v495, %v539
    %v541 = vsel %vm315, %v540, %v536
    %v542 = vsel %vm336, %v541, %v522
    %544 = vst.msk [vmem:[#allocation17] sm:$0x3] %vm339, %v542
    %v545 = vld [vmem:[#allocation11] sm:$0xff]
    %v546 = vld [vmem:[#allocation11 + $0x8] sm:$0xff]
    %v547 = vld [vmem:[#allocation11 + $0x10] sm:$0xff]
    %v548 = vld [vmem:[#allocation11 + $0x18] sm:$0xff]
    %v549 = vld [vmem:[#allocation11 + $0x20] sm:$0xff]
    %v550 = vld [vmem:[#allocation11 + $0x28] sm:$0xff]
    %v551 = vld [vmem:[#allocation11 + $0x30] sm:$0xff]
    %v552 = vld [vmem:[#allocation11 + $0x38] sm:$0xff]
    %v553 = vmul.f32 %v545, %v352
    %v554 = vmul.f32 %v546, %v352
    %v555 = vmul.f32 %v547, %v352
    %v556 = vmul.f32 %v548, %v352
    %v557 = vmul.f32 %v549, %v356
    %v558 = vmul.f32 %v550, %v356
    %v559 = vmul.f32 %v551, %v356
    %v560 = vmul.f32 %v552, %v356
    %v561 = vsel %vm123, %v553, 0.0
    %562 = vadd.xlane.f32.xlu0 %v561
    %v563 = vpop.xlane.xlu0 %562
    %v564 = vsel %vm123, %v554, 0.0
    %565 = vadd.xlane.f32.xlu0 %v564
    %v566 = vpop.xlane.xlu0 %565
    %v567 = vsel %vm123, %v555, 0.0
    %568 = vadd.xlane.f32.xlu0 %v567
    %v569 = vpop.xlane.xlu0 %568
    %v570 = vsel %vm123, %v556, 0.0
    %571 = vadd.xlane.f32.xlu0 %v570
    %v572 = vpop.xlane.xlu0 %571
    %v573 = vsel %vm123, %v557, 0.0
    %574 = vadd.xlane.f32.xlu0 %v573
    %v575 = vpop.xlane.xlu0 %574
    %v576 = vsel %vm123, %v558, 0.0
    %577 = vadd.xlane.f32.xlu0 %v576
    %v578 = vpop.xlane.xlu0 %577
    %v579 = vsel %vm123, %v559, 0.0
    %580 = vadd.xlane.f32.xlu0 %v579
    %v581 = vpop.xlane.xlu0 %580
    %v582 = vsel %vm123, %v560, 0.0
    %583 = vadd.xlane.f32.xlu0 %v582
    %v584 = vpop.xlane.xlu0 %583
    %v585 = vadd.f32 %v563, %v273
    %v586 = vadd.f32 %v566, %v273
    %v587 = vadd.f32 %v569, %v273
    %v588 = vadd.f32 %v572, %v273
    %v589 = vadd.f32 %v575, %v273
    %v590 = vadd.f32 %v578, %v273
    %v591 = vadd.f32 %v581, %v273
    %v592 = vadd.f32 %v584, %v273
    %v601 = vlaneseq
    %v602 = vshrl.u32 %v601, 7
    %v603 = vsub.s32 %v291, %v602
    %v604 = vrot.slane %v585, %v603
    %v605 = vlaneseq
    %v606 = vshrl.u32 %v605, 7
    %v607 = vsub.s32 %v296, %v606
    %v608 = vrot.slane %v586, %v607
    %v609 = vsel %vm301, %v608, %v604
    %v610 = vlaneseq
    %v611 = vshrl.u32 %v610, 7
    %v612 = vsub.s32 %v303, %v611
    %v613 = vrot.slane %v587, %v612
    %v614 = vsel %vm308, %v613, %v609
    %v615 = vlaneseq
    %v616 = vshrl.u32 %v615, 7
    %v617 = vsub.s32 %v310, %v616
    %v618 = vrot.slane %v588, %v617
    %v619 = vsel %vm315, %v618, %v614
    %v620 = vlaneseq
    %v621 = vshrl.u32 %v620, 7
    %v622 = vsub.s32 %v291, %v621
    %v623 = vrot.slane %v589, %v622
    %v624 = vlaneseq
    %v625 = vshrl.u32 %v624, 7
    %v626 = vsub.s32 %v296, %v625
    %v627 = vrot.slane %v590, %v626
    %v628 = vsel %vm301, %v627, %v623
    %v629 = vlaneseq
    %v630 = vshrl.u32 %v629, 7
    %v631 = vsub.s32 %v303, %v630
    %v632 = vrot.slane %v591, %v631
    %v633 = vsel %vm308, %v632, %v628
    %v634 = vlaneseq
    %v635 = vshrl.u32 %v634, 7
    %v636 = vsub.s32 %v310, %v635
    %v637 = vrot.slane %v592, %v636
    %v638 = vsel %vm315, %v637, %v633
    %v639 = vsel %vm336, %v638, %v619
    %641 = vst.msk [vmem:[#allocation18] sm:$0x3] %vm339, %v639
    // Predicated region
    $region54: #{tpu_custom_call.1} parent=1 // pred_check
      _
    $region55: #{tpu_custom_call.1} parent=1 // pred_check_branch
      %643 = sbr.rel (0) target = $region57
    $region56: #{tpu_custom_call.1} parent=1 // pred_region
      %s645 = ssub.s32 32, 32
      %646 = vsyncadd [#allocation5], %s645
      %s648 = sshll.u32 [#allocation14], 4
      %s649 = int_to_ptr.vmem [resolvable:$true] %s648
      %651 = dma.vmem_to_hbm [thread:$0]  %s649, 32, %s7, [#allocation5]
    $region57: #{tpu_custom_call.1} parent=1 // pred_fallthru
      _
    // Predicated region
    $region58: #{tpu_custom_call.1} parent=1 // pred_check
      _
    $region59: #{tpu_custom_call.1} parent=1 // pred_check_branch
      %653 = sbr.rel (0) target = $region61
    $region60: #{tpu_custom_call.1} parent=1 // pred_region
      %s655 = ssub.s32 32, 32
      %656 = vsyncadd [#allocation16], %s655
      %s658 = sshll.u32 [#allocation15], 4
      %s659 = int_to_ptr.vmem [resolvable:$true] %s658
      %661 = dma.vmem_to_hbm [thread:$0]  %s659, 32, %s8, [#allocation16]
    $region61: #{tpu_custom_call.1} parent=1 // pred_fallthru
      _
    // Predicated region
    $region62: #{tpu_custom_call.1} parent=1 // pred_check
      _
    $region63: #{tpu_custom_call.1} parent=1 // pred_check_branch
      %663 = sbr.rel (0) target = $region65
    $region64: #{tpu_custom_call.1} parent=1 // pred_region
      %s665 = ssub.s32 32, 32
      %666 = vsyncadd [#allocation16], %s665
      %s668 = sshll.u32 [#allocation17], 4
      %s669 = int_to_ptr.vmem [resolvable:$true] %s668
      %671 = dma.vmem_to_hbm [thread:$0]  %s669, 32, %s9, [#allocation16]
    $region65: #{tpu_custom_call.1} parent=1 // pred_fallthru
      _
    // Predicated region
    $region66: #{tpu_custom_call.1} parent=1 // pred_check
      _
    $region67: #{tpu_custom_call.1} parent=1 // pred_check_branch
      %673 = sbr.rel (0) target = $region69
    $region68: #{tpu_custom_call.1} parent=1 // pred_region
      %s675 = ssub.s32 32, 32
      %676 = vsyncadd [#allocation19], %s675
      %s678 = sshll.u32 [#allocation18], 4
      %s679 = int_to_ptr.vmem [resolvable:$true] %s678
      %681 = dma.vmem_to_hbm [thread:$0]  %s679, 32, %s10, [#allocation19]
    $region69: #{tpu_custom_call.1} parent=1 // pred_fallthru
      _
    // Predicated region
    $region70: #{tpu_custom_call.1} parent=1 // pred_check
      _
    $region71: #{tpu_custom_call.1} parent=1 // pred_check_branch
      %683 = sbr.rel (0) target = $region73
    $region72: #{tpu_custom_call.1} parent=1 // pred_region
      %684 = dma.done [#allocation5], 32
    $region73: #{tpu_custom_call.1} parent=1 // pred_fallthru
      _
    // Predicated region
    $region74: #{tpu_custom_call.1} parent=1 // pred_check
      _
    $region75: #{tpu_custom_call.1} parent=1 // pred_check_branch
      %686 = sbr.rel (0) target = $region77
    $region76: #{tpu_custom_call.1} parent=1 // pred_region
      %687 = dma.done [#allocation16], 32
    $region77: #{tpu_custom_call.1} parent=1 // pred_fallthru
      _
    // Predicated region
    $region78: #{tpu_custom_call.1} parent=1 // pred_check
      _
    $region79: #{tpu_custom_call.1} parent=1 // pred_check_branch
      %689 = sbr.rel (0) target = $region81
    $region80: #{tpu_custom_call.1} parent=1 // pred_region
      %690 = dma.done [#allocation16], 32
    $region81: #{tpu_custom_call.1} parent=1 // pred_fallthru
      _
    // Predicated region
    $region82: #{tpu_custom_call.1} parent=1 // pred_check
      _
    $region83: #{tpu_custom_call.1} parent=1 // pred_check_branch
      %692 = sbr.rel (0) target = $region85
    $region84: #{tpu_custom_call.1} parent=1 // pred_region
      %693 = dma.done [#allocation19], 32
    $region85: #{tpu_custom_call.1} parent=1 // pred_fallthru
      _
    %694 = vsyncpa [#allocation4], 1
    %695 = vsyncpa [#allocation7], 1
    %696 = vsyncpa [#allocation10], 1
    %697 = vsyncpa [#allocation13], 1
    %698 = vsyncpa [#allocation5], 1
    %699 = vsyncpa [#allocation16], 1
    %700 = vsyncpa [#allocation19], 1

</llo_original>
